<compile_context>
chip_gen: v7x
topology: tpu7x:2x2x1
jax: 0.10.0
libtpu: 0.0.40
codegen_flags: <defaults>
</compile_context>

<pallas_src>
import functools

import jax
import jax.numpy as jnp
from jax.experimental import pallas as pl
from jax.experimental.pallas import tpu as pltpu

_EPS = 1e-7


# ---------------------------------------------------------------------------
# Chip budgets
# ---------------------------------------------------------------------------
@functools.lru_cache(maxsize=1)
def _budgets():
    """Returns (target f32 block bytes per grid step, VMEM request cap)."""
    try:
        vmem = int(pltpu.get_tpu_info().vmem_capacity_bytes)
    except Exception:  # pragma: no cover - conservative default (v7x per-TC)
        vmem = 64 * 2**20
    # ~6 MiB of f32 work per step: 6x buffers still fit v7x's 64 MiB VMEM and
    # per-step overhead drops below ~7% of the HBM stream time on all chips.
    target = int(min(6 * 2**20, vmem // 10))
    # Never request more than the chip physically has (v7x: 64 MiB per TC).
    cap = int(max(16 * 2**20, min(vmem - 8 * 2**20, 96 * 2**20)))
    return target, cap


def _vmem_need(io_block_bytes, f32_block_bytes):
    # in + out, double-buffered, + in-kernel f32 temporaries + headroom.
    return 4 * io_block_bytes + 2 * f32_block_bytes + (2 << 20)


def _sub_mult(itemsize):
    # Sublane tile granularity: 8 (f32), 16 (bf16), 32 (int8/fp8).
    return max(8, 32 // int(itemsize))


# ---------------------------------------------------------------------------
# In-kernel math
# ---------------------------------------------------------------------------
def _elem_pow(x, power):
    """x**power; repeated VPU multiplies for small integer powers."""
    if float(power).is_integer() and 1 <= int(power) <= 8:
        p = int(power)
        y = x
        for _ in range(p - 1):
            y = y * x
        return y
    return jnp.power(x, power)


def _root(s, power):
    if power == 2:
        return jnp.sqrt(s)
    return jnp.power(s, 1.0 / power)


def _make_kernel(power, reduce_axis):
    def kernel(x_ref, o_ref):
        x = x_ref[...]
        xf = x.astype(jnp.float32)
        # Reduce in f32 regardless of the I/O dtype.
        s = jnp.sum(_elem_pow(xf, power), axis=reduce_axis, keepdims=True)
        # One exact reciprocal per normalized row, then a VPU broadcast mul.
        inv = 1.0 / (_root(s, power) + _EPS)
        if o_ref.dtype == jnp.float32:
            o_ref[...] = xf * inv
        else:
            # sub-32-bit I/O: scale in the native dtype (bf16 VPU on v6e/v7x),
            # avoiding a second full f32 tile on the store path.
            o_ref[...] = (x * inv.astype(x.dtype)).astype(o_ref.dtype)

    return kernel


# ---------------------------------------------------------------------------
# Reference (also used as the XLA fallback for perf-pathological shapes)
# ---------------------------------------------------------------------------
def _reference(x, power: int = 2):
    norm = jnp.power(
        jnp.sum(jnp.power(x, power), axis=1, keepdims=True), 1.0 / power
    )
    return x / (norm + _EPS)


# ---------------------------------------------------------------------------
# Tiled paths
# ---------------------------------------------------------------------------
def _normalize_2d(x, power):
    """(R, C) with C >= 128: C on lanes, reduce over lanes."""
    R, C = x.shape
    item = x.dtype.itemsize
    target, cap = _budgets()
    sub = _sub_mult(item)

    if R * C * 4 <= target or R <= sub:
        tr = R
    else:
        tr = max(sub, ((target // (C * 4)) // sub) * sub)

    # Megacore: keep >= 2 grid steps on mid/large inputs so both TCs get work.
    if pl.cdiv(R, tr) == 1 and R * C * 4 > (4 << 20) and R >= 2 * sub:
        tr = max(sub, ((R // 2) // sub) * sub)

    io_blk = tr * C * item
    f32_blk = tr * C * 4
    need = _vmem_need(io_blk, f32_blk)
    if need > cap:
        # TODO(synk): add a C-split ("arbitrary") accumulator grid axis for
        # very large feature dims instead of falling back to XLA.
        return _reference(x, power)

    return pl.pallas_call(
        _make_kernel(power, reduce_axis=-1),
        out_shape=jax.ShapeDtypeStruct((R, C), x.dtype),
        grid_spec=pltpu.PrefetchScalarGridSpec(
            num_scalar_prefetch=0,
            grid=(pl.cdiv(R, tr),),
            in_specs=[pl.BlockSpec((tr, C), lambda i: (i, 0))],
            out_specs=pl.BlockSpec((tr, C), lambda i: (i, 0)),
        ),
        compiler_params=pltpu.CompilerParams(
            dimension_semantics=("parallel",),
            vmem_limit_bytes=int(min(max(need, 4 << 20), cap)),
        ),
    )(x)


def _normalize_nc_l(x3, power):
    """(N, C, L): reduce over C (sublane side), L on lanes, block grows over N."""
    N, C, L = x3.shape
    item = x3.dtype.itemsize
    target, cap = _budgets()

    if C * L * 4 <= target or L < 256:
        tl = L
    else:
        tl = max(128, ((target // (C * 4)) // 128) * 128)

    if tl == L:
        # Small spatial extent: pack the batch dim into the block to amortize
        # per-step overhead and issue larger DMAs.
        bn = max(1, min(N, target // max(C * L * 4, 1)))
    else:
        bn = 1

    # Megacore: keep >= 2 grid steps on mid/large inputs.
    steps = pl.cdiv(N, bn) * pl.cdiv(L, tl)
    if steps == 1 and N * C * L * 4 > (4 << 20):
        if N >= 2:
            bn = pl.cdiv(N, 2)
        elif L >= 256:
            tl = max(128, ((L // 2) // 128) * 128)

    io_blk = bn * C * tl * item
    f32_blk = bn * C * tl * 4
    need = _vmem_need(io_blk, f32_blk)
    if need > cap:
        # TODO(synk): add a C-split ("arbitrary") accumulator grid axis for
        # very large channel counts instead of falling back to XLA.
        return _reference(x3, power)

    return pl.pallas_call(
        _make_kernel(power, reduce_axis=1),
        out_shape=jax.ShapeDtypeStruct((N, C, L), x3.dtype),
        grid_spec=pltpu.PrefetchScalarGridSpec(
            num_scalar_prefetch=0,
            grid=(pl.cdiv(N, bn), pl.cdiv(L, tl)),
            in_specs=[pl.BlockSpec((bn, C, tl), lambda n, l: (n, 0, l))],
            out_specs=pl.BlockSpec((bn, C, tl), lambda n, l: (n, 0, l)),
        ),
        compiler_params=pltpu.CompilerParams(
            dimension_semantics=("parallel", "parallel"),
            vmem_limit_bytes=int(min(max(need, 4 << 20), cap)),
        ),
    )(x3)


def _normalize_small_c(x4, power):
    """(N, C, Lb, 128) with small C: the last two dims form a dense
    (sublane, lane) tile regardless of C, so the C-reduction is plain per-vreg
    VPU adds and stores are unmasked."""
    N, C, Lb, LANE = x4.shape
    item = x4.dtype.itemsize
    target, cap = _budgets()
    sub = _sub_mult(item)

    per_row_bytes = C * LANE * 4  # f32 bytes for one (1, C, 1, 128) slab
    if Lb * per_row_bytes <= target or Lb <= sub:
        ts = Lb
    else:
        ts = max(sub, ((target // per_row_bytes) // sub) * sub)

    if ts == Lb:
        bn = max(1, min(N, target // max(Lb * per_row_bytes, 1)))
    else:
        bn = 1

    steps = pl.cdiv(N, bn) * pl.cdiv(Lb, ts)
    if steps == 1 and N * C * Lb * LANE * 4 > (4 << 20):
        if N >= 2:
            bn = pl.cdiv(N, 2)
        elif Lb >= 2 * sub:
            ts = max(sub, ((Lb // 2) // sub) * sub)

    io_blk = bn * C * ts * LANE * item
    f32_blk = bn * C * ts * LANE * 4
    need = _vmem_need(io_blk, f32_blk)
    if need > cap:
        return _reference(x4, power)

    return pl.pallas_call(
        _make_kernel(power, reduce_axis=1),
        out_shape=jax.ShapeDtypeStruct(x4.shape, x4.dtype),
        grid_spec=pltpu.PrefetchScalarGridSpec(
            num_scalar_prefetch=0,
            grid=(pl.cdiv(N, bn), pl.cdiv(Lb, ts)),
            in_specs=[pl.BlockSpec((bn, C, ts, LANE), lambda n, l: (n, 0, l, 0))],
            out_specs=pl.BlockSpec((bn, C, ts, LANE), lambda n, l: (n, 0, l, 0)),
        ),
        compiler_params=pltpu.CompilerParams(
            dimension_semantics=("parallel", "parallel"),
            vmem_limit_bytes=int(min(max(need, 4 << 20), cap)),
        ),
    )(x4)


# ---------------------------------------------------------------------------
# Public wrapper
# ---------------------------------------------------------------------------
def normalize(x, power: int = 2):
    """Pallas equivalent of Normalize(power).forward(x); reduces over dim 1."""
    if x.ndim == 2:
        R, C = x.shape
        if C < 128:
            # <128 lanes -> masked vst / <=25% lane utilization; for a purely
            # memory-bound op a Pallas call is pure overhead here. Use XLA.
            return _reference(x, power)
        return _normalize_2d(x, power)
    if x.ndim >= 3:
        shp = x.shape
        N, C = shp[0], shp[1]
        L = 1
        for d in shp[2:]:
            L *= d
        if C < 8 and L >= 128 and L % 128 == 0:
            # Small channel count: fold spatial extent into dense (L//128,128)
            # tiles instead of putting C (half-empty) on sublanes.
            out = _normalize_small_c(x.reshape(N, C, L // 128, 128), power)
        else:
            out = _normalize_nc_l(x.reshape(N, C, L), power)  # reshape is free
        return out.reshape(shp)
    raise ValueError(f"unsupported rank {x.ndim}")


# ---------------------------------------------------------------------------
# Self-test
# ---------------------------------------------------------------------------
if __name__ == "__main__":
    key = jax.random.PRNGKey(0)
    k1, k2, k3, k4, k5 = jax.random.split(key, 5)

    # 4-D NCHW, small channel count (dense reshaped (Lb,128) path).
    x4 = jax.random.normal(k1, (2, 4, 16, 16), dtype=jnp.float32)
    # 4-D NCHW with C >= 8 (general sublane-reduce path).
    x4b = jax.random.normal(k2, (2, 16, 16, 16), dtype=jnp.float32)
    # 2-D (N, feat) embedding, feat >= 128 (lane-reduce Pallas path).
    x2 = jax.random.normal(k3, (8, 256), dtype=jnp.float32)
    # 2-D tiny feature dim (dispatches to XLA; lane-sparse Pallas is pure overhead).
    x2s = jax.random.normal(k4, (8, 32), dtype=jnp.float32)
    # bf16 NCHW (native-dtype scale path).
    x4h = jax.random.normal(k5, (2, 4, 16, 16), dtype=jnp.bfloat16)

    for name, xin in [("x4", x4), ("x4b", x4b), ("x2", x2),
                      ("x2s", x2s), ("x4h", x4h)]:
        out = jax.block_until_ready(normalize(xin, power=2))
        assert out.shape == xin.shape and out.dtype == xin.dtype, name
        ref = _reference(xin.astype(jnp.float32), power=2).astype(xin.dtype)
        tol = 1e-5 if xin.dtype == jnp.float32 else 2e-2
        assert jnp.allclose(out.astype(jnp.float32), ref.astype(jnp.float32),
                            atol=tol, rtol=tol), name

    print("KERNEL_OK")
</pallas_src>

<mosaic_0001>
module attributes {stable_mosaic.version = 11 : i64} {
  func.func @kernel(%arg0: i32, %arg1: i32, %arg2: memref<2x4x2x128xf32, #tpu.memory_space<vmem>>, %arg3: memref<2x4x2x128xf32, #tpu.memory_space<vmem>>) attributes {dimension_semantics = [#tpu.dimension_semantics<parallel>, #tpu.dimension_semantics<parallel>], iteration_bounds = array<i64: 1, 1>, scalar_prefetch = 0 : i64, scratch_operands = 0 : i64, tpu.core_type = #tpu.core_type<tc>, window_params = [{transform_indices = @transform_0, window_bounds = array<i64: 2, 4, 2, 128>}, {transform_indices = @transform_1, window_bounds = array<i64: 2, 4, 2, 128>}]} {
    %c0 = arith.constant 0 : index
    %c0_0 = arith.constant 0 : index
    %c0_1 = arith.constant 0 : index
    %c0_2 = arith.constant 0 : index
    %0 = vector.load %arg2[%c0, %c0_0, %c0_1, %c0_2] : memref<2x4x2x128xf32, #tpu.memory_space<vmem>>, vector<2x4x2x128xf32>
    %1 = arith.mulf %0, %0 : vector<2x4x2x128xf32>
    %cst = arith.constant dense<0.000000e+00> : vector<2x2x128xf32>
    %2 = vector.multi_reduction <add>, %1, %cst [1] : vector<2x4x2x128xf32> to vector<2x2x128xf32>
    %3 = vector.shape_cast %2 : vector<2x2x128xf32> to vector<2x1x2x128xf32>
    %4 = math.sqrt %3 : vector<2x1x2x128xf32>
    %cst_3 = arith.constant 1.000000e-07 : f32
    %5 = vector.broadcast %cst_3 : f32 to vector<2x1x2x128xf32>
    %6 = arith.addf %4, %5 : vector<2x1x2x128xf32>
    %cst_4 = arith.constant 1.000000e+00 : f32
    %7 = vector.broadcast %cst_4 : f32 to vector<2x1x2x128xf32>
    %8 = arith.divf %7, %6 : vector<2x1x2x128xf32>
    %9 = vector.broadcast %8 : vector<2x1x2x128xf32> to vector<2x4x2x128xf32>
    %10 = arith.mulf %0, %9 : vector<2x4x2x128xf32>
    %c0_5 = arith.constant 0 : index
    %c0_6 = arith.constant 0 : index
    %c0_7 = arith.constant 0 : index
    %c0_8 = arith.constant 0 : index
    %11 = vector.load %arg3[%c0_5, %c0_6, %c0_7, %c0_8] : memref<2x4x2x128xf32, #tpu.memory_space<vmem>>, vector<2x4x2x128xf32>
    tpu.vector_store %arg3[%c0_5, %c0_6, %c0_7, %c0_8], %10 {strides = array<i32>} : memref<2x4x2x128xf32, #tpu.memory_space<vmem>>, vector<2x4x2x128xf32>,
    return
  }
  func.func @transform_0(%arg0: i32, %arg1: i32) -> (i32, i32, i32, i32) {
    %c0_i32 = arith.constant 0 : i32
    %c0_i32_0 = arith.constant 0 : i32
    %c0_i32_1 = arith.constant 0 : i32
    return %arg0, %c0_i32, %arg1, %c0_i32_0 : i32, i32, i32, i32
  }
  func.func @transform_1(%arg0: i32, %arg1: i32) -> (i32, i32, i32, i32) {
    %c0_i32 = arith.constant 0 : i32
    %c0_i32_0 = arith.constant 0 : i32
    %c0_i32_1 = arith.constant 0 : i32
    return %arg0, %c0_i32, %arg1, %c0_i32_0 : i32, i32, i32, i32
  }
}

</mosaic_0001>

<llo_original>
// kernel: tpu_custom_call.1
$region0: #{tpu_custom_call.1}
  #allocation0 [shape = 'u32[]', space=smem, size = 0x4, offset = 0x4, fixed_abs, tag = 'smem constant byte address 0x4 - core index']
  #allocation1 [shape = 'u32[144,128]{1,0:T(1,128)}', space=vmem, size = 0x12000, scoped, tag = 'internal scratch']
  %s0 = inlined_call_operand.hbm [shape: f32[2,4,2,128], index: 0, kind: input, shape index: {}]
  %s1 = inlined_call_operand.hbm [shape: f32[2,4,2,128], index: 1, kind: output, shape index: {}]
  %s2 = sld [smem:[#allocation0]]
  $region18: #{tpu_custom_call.1} parent=0
    _
  %s4 = ssub.s32 1, %s2
  %s5 = scalar_select 0, %s4, %s2
  $region1: #{tpu_custom_call.1} parent=0
    #allocation2 [shape = 'u8[8192]{0}', space=vmem, size = 0x2000, scoped, tag = 'input window, operand 0, single buffered']
    #allocation3 [shape = 's32[1]{0}', space=sflag, size = 0x4, scoped, tag = 'scoped memory for tpu_custom_call.1']
    #allocation4 [shape = 's32[1]{0}', space=sflag, size = 0x4, scoped, tag = 'scoped memory for tpu_custom_call.1']
    #allocation5 [shape = 'u8[8192]{0}', space=vmem, size = 0x2000, scoped, tag = 'output window, operand 0, single buffered']
    %6 = vsyncpa [#allocation3], 0
    %7 = vsyncpa [#allocation4], 0
    // Predicated region
    $region2: #{tpu_custom_call.1} parent=1 // pred_check
      _
    $region3: #{tpu_custom_call.1} parent=1 // pred_check_branch
      %9 = sbr.rel (0) target = $region5
    $region4: #{tpu_custom_call.1} parent=1 // pred_region
      %s11 = ssub.s32 256, 256
      %12 = vsyncadd [#allocation3], %s11
      %s13 = sshll.u32 [#allocation2], 4
      %s14 = int_to_ptr.vmem [resolvable:$true] %s13
      %19 = dma.hbm_to_vmem [thread:$0]  %s0, 256, %s14, [#allocation3], 32, 32, 2
    $region5: #{tpu_custom_call.1} parent=1 // pred_fallthru
      _
    // Predicated region
    $region6: #{tpu_custom_call.1} parent=1 // pred_check
      _
    $region7: #{tpu_custom_call.1} parent=1 // pred_check_branch
      %21 = sbr.rel (0) target = $region9
    $region8: #{tpu_custom_call.1} parent=1 // pred_region
      %22 = dma.done [#allocation3], 256
    $region9: #{tpu_custom_call.1} parent=1 // pred_fallthru
      _
    %v23 = vld [vmem:[#allocation2] sm:$0x3]
    %v24 = vld [vmem:[#allocation2 + $0x2] sm:$0x3]
    %v25 = vld [vmem:[#allocation2 + $0x4] sm:$0x3]
    %v26 = vld [vmem:[#allocation2 + $0x6] sm:$0x3]
    %v27 = vld [vmem:[#allocation2 + $0x8] sm:$0x3]
    %v28 = vld [vmem:[#allocation2 + $0xa] sm:$0x3]
    %v29 = vld [vmem:[#allocation2 + $0xc] sm:$0x3]
    %v30 = vld [vmem:[#allocation2 + $0xe] sm:$0x3]
    %v31 = vmul.f32 %v23, %v23
    %v32 = vmul.f32 %v24, %v24
    %v33 = vmul.f32 %v25, %v25
    %v34 = vmul.f32 %v26, %v26
    %v35 = vmul.f32 %v27, %v27
    %v36 = vmul.f32 %v28, %v28
    %v37 = vmul.f32 %v29, %v29
    %v38 = vmul.f32 %v30, %v30
    %vm39 = vcmask 1041408
    %v40 = vsel %vm39, %v31, 0.0
    %v41 = vsel %vm39, %v32, 0.0
    %v42 = vadd.f32 %v40, %v41
    %v43 = vsel %vm39, %v33, 0.0
    %v44 = vadd.f32 %v42, %v43
    %v45 = vsel %vm39, %v34, 0.0
    %v46 = vadd.f32 %v44, %v45
    %v47 = vsel %vm39, %v35, 0.0
    %v48 = vsel %vm39, %v36, 0.0
    %v49 = vadd.f32 %v47, %v48
    %v50 = vsel %vm39, %v37, 0.0
    %v51 = vadd.f32 %v49, %v50
    %v52 = vsel %vm39, %v38, 0.0
    %v53 = vadd.f32 %v51, %v52
    %v54 = vrsqrt.pop %v46
    %v55 = vmul.f32 %v46, %v54
    %vm56 = vcmp.eq.f32.partialorder %v46, inf
    %v57 = vsel %vm56, %v46, %v55
    %vm58 = vcmp.eq.f32.partialorder %v46, 0.0
    %v59 = vand.u32 %v46, 2147483648
    %v60 = vsel %vm58, %v59, %v57
    %v61 = vrsqrt.pop %v53
    %v62 = vmul.f32 %v53, %v61
    %vm63 = vcmp.eq.f32.partialorder %v53, inf
    %v64 = vsel %vm63, %v53, %v62
    %vm65 = vcmp.eq.f32.partialorder %v53, 0.0
    %v66 = vand.u32 %v53, 2147483648
    %v67 = vsel %vm65, %v66, %v64
    %v68 = vadd.f32 %v60, 1e-07
    %v69 = vadd.f32 %v67, 1e-07
    %v70 = vrcp.pop %v68
    %v71 = vmul.f32 1.0, %v70
    %v72 = vrcp.pop %v69
    %v73 = vmul.f32 1.0, %v72
    %v74 = vmul.f32 %v23, %v71
    %v75 = vmul.f32 %v24, %v71
    %v76 = vmul.f32 %v25, %v71
    %v77 = vmul.f32 %v26, %v71
    %v78 = vmul.f32 %v27, %v73
    %v79 = vmul.f32 %v28, %v73
    %v80 = vmul.f32 %v29, %v73
    %v81 = vmul.f32 %v30, %v73
    %82 = vst [vmem:[#allocation5] sm:$0x3] %v74
    %83 = vst [vmem:[#allocation5 + $0x2] sm:$0x3] %v75
    %84 = vst [vmem:[#allocation5 + $0x4] sm:$0x3] %v76
    %85 = vst [vmem:[#allocation5 + $0x6] sm:$0x3] %v77
    %86 = vst [vmem:[#allocation5 + $0x8] sm:$0x3] %v78
    %87 = vst [vmem:[#allocation5 + $0xa] sm:$0x3] %v79
    %88 = vst [vmem:[#allocation5 + $0xc] sm:$0x3] %v80
    %89 = vst [vmem:[#allocation5 + $0xe] sm:$0x3] %v81
    // Predicated region
    $region10: #{tpu_custom_call.1} parent=1 // pred_check
      _
    $region11: #{tpu_custom_call.1} parent=1 // pred_check_branch
      %91 = sbr.rel (0) target = $region13
    $region12: #{tpu_custom_call.1} parent=1 // pred_region
      %s93 = ssub.s32 256, 256
      %94 = vsyncadd [#allocation4], %s93
      %s95 = sshll.u32 [#allocation5], 4
      %s96 = int_to_ptr.vmem [resolvable:$true] %s95
      %101 = dma.vmem_to_hbm [thread:$0]  %s96, 256, %s1, [#allocation4], 32, 32, 2
    $region13: #{tpu_custom_call.1} parent=1 // pred_fallthru
      _
    // Predicated region
    $region14: #{tpu_custom_call.1} parent=1 // pred_check
      _
    $region15: #{tpu_custom_call.1} parent=1 // pred_check_branch
      %103 = sbr.rel (0) target = $region17
    $region16: #{tpu_custom_call.1} parent=1 // pred_region
      %104 = dma.done [#allocation4], 256
    $region17: #{tpu_custom_call.1} parent=1 // pred_fallthru
      _
    %105 = vsyncpa [#allocation3], 1
    %106 = vsyncpa [#allocation4], 1

</llo_original>
